<compile_context>
chip_gen: v7x
topology: tpu7x:2x2x1
jax: 0.10.0
libtpu: 0.0.40
codegen_flags: <defaults>
</compile_context>

<pallas_src>
import jax
import jax.numpy as jnp
from jax.experimental import pallas as pl
from jax.experimental.pallas import tpu as pltpu


_PAD = 16            # tile-aligned column offset of the strip body in the scratch
_MIN_GRID_STEPS = 8  # keep the pipeline (and v7x's 2 TensorCores) busy


# ----------------------------------------------------------------------------
# Weight folding: conv3x3(stride1,pad1) + PixelUnshuffle(2)  ==
#    conv3x3(stride1,pad1) on space-to-depth(2) input with folded weights.
# ----------------------------------------------------------------------------
def fold_conv_unshuffle_weights(w_oihw):
    """w_oihw: (Cout, Cin, 3, 3) PyTorch layout ->
    folded weights (9, 4*Cin, 4*Cout); tap index = 3*kh + kw,
    output channel = co*4 + 2r + s (PixelUnshuffle order)."""
    cout, cin = int(w_oihw.shape[0]), int(w_oihw.shape[1])
    wf = jnp.zeros((3, 3, 4 * cin, 4 * cout), w_oihw.dtype)
    for r in range(2):
        for s in range(2):
            for kh in range(3):
                for kw in range(3):
                    t = r + kh - 1          # original row offset
                    u = s + kw - 1          # original col offset
                    a, p = t // 2, t % 2    # superpixel row offset / row parity
                    b, q = u // 2, u % 2    # superpixel col offset / col parity
                    blk = jnp.transpose(w_oihw[:, :, kh, kw])   # (Cin, Cout)
                    wf = wf.at[a + 1, b + 1,
                               (2 * p + q) * cin:(2 * p + q + 1) * cin,
                               (2 * r + s)::4].set(blk)
    return wf.reshape(9, 4 * cin, 4 * cout)


def space_to_depth_nchw(x_nchw):
    """(N, Cin, H, W) -> (N, H/2, W/2, 4*Cin), channel = (p*2+q)*Cin + ci.
    Single XLA relayout; replaces the NCHW->NHWC transpose."""
    n, c, h, w = x_nchw.shape
    x = x_nchw.reshape(n, c, h // 2, 2, w // 2, 2)
    x = jnp.transpose(x, (0, 2, 4, 3, 5, 1))       # n, h2, w2, p, q, ci
    return x.reshape(n, h // 2, w // 2, 4 * c)


# ----------------------------------------------------------------------------
# Fused kernel: 3x3 same-conv on the space-to-depth input, strip-tiled over H/2.
# ----------------------------------------------------------------------------
def _make_kernel(hs, ths, need_row_mask):
    def kernel(xm_ref, xt_ref, xb_ref, w_ref, o_ref, xpad_ref):
        # xm_ref  : (ths, ws, Cin4)        main row strip
        # xt_ref  : (1,   ws, Cin4)        row above strip (clamped at top)
        # xb_ref  : (1,   ws, Cin4)        row below strip (clamped at bottom)
        # w_ref   : (9, Cin4, Cout4)       folded weights, tap = 3*kh + kw
        # o_ref   : (ths, ws, Cout4) f32   output strip
        # xpad_ref: (ths+2, ws+_PAD+1, Cin4) padded strip scratch
        i = pl.program_id(1)
        _, ws, cin4 = xm_ref.shape
        dt = xm_ref.dtype

        x = xm_ref[...]
        if need_row_mask:
            # cdiv gridding: zero rows past the image bottom in the short last
            # strip so the row-below tap of the last valid row reads zeros.
            rows_left = hs - i * ths
            rid = jax.lax.broadcasted_iota(jnp.int32, (ths, ws, cin4), 0)
            x = jnp.where(rid < rows_left, x, jnp.zeros_like(x))

        # --- assemble the padded strip (aligned body store, no HBM padding) ---
        xpad_ref[1:ths + 1, _PAD:_PAD + ws, :] = x
        xpad_ref[0:1, _PAD:_PAD + ws, :] = xt_ref[...] * (i > 0).astype(dt)
        xpad_ref[ths + 1:ths + 2, _PAD:_PAD + ws, :] = (
            xb_ref[...] * ((i + 1) * ths < hs).astype(dt))
        zcol = jnp.zeros((ths + 2, 1, cin4), dt)
        xpad_ref[:, _PAD - 1:_PAD, :] = zcol              # left zero column
        xpad_ref[:, _PAD + ws:_PAD + ws + 1, :] = zcol    # right zero column

        # --- 9 accumulating MXU matmuls (K = Cin4), accumulate in a value -----
        acc = None
        for kh in range(3):
            for kw in range(3):
                lhs = xpad_ref[kh:kh + ths,
                               _PAD - 1 + kw:_PAD - 1 + kw + ws, :]
                contrib = jnp.dot(lhs, w_ref[3 * kh + kw],
                                  preferred_element_type=jnp.float32)
                acc = contrib if acc is None else acc + contrib

        # lane-dense f32 store straight from the accumulator
        o_ref[...] = acc.astype(o_ref.dtype)

    return kernel


def _vmem_policy():
    """Returns (vmem_limit_bytes or None, per-step working-set budget bytes)."""
    try:
        phys = int(pltpu.get_tpu_info().vmem_capacity_bytes)
        limit = min((phys * 3) // 4, 96 * 1024 * 1024)  # ~48 MiB v7x, 96 MiB v5e/v6e
        return limit, (limit * 2) // 3
    except Exception:
        # Unknown part: stay under every generation's default scoped-VMEM limit.
        return None, 12 * 1024 * 1024


def _pick_strip_rows(hs, ws, cin4, cout4, in_bytes, n_batch, budget_bytes):
    """Strip height: as tall as the VMEM budget allows, but short enough to
    give the pipeline (and the v7x 2-TC megacore) >= _MIN_GRID_STEPS steps."""
    per_row = (ws * cin4 * in_bytes * 3                     # 2x input bufs + LHS
               + (ws + _PAD + 1) * cin4 * in_bytes          # padded scratch row
               + ws * cout4 * 4 * 4)                        # 2x f32 out + acc + dot
    fixed = (4 * ws * cin4 * in_bytes                       # halo rows (2x, db)
             + 2 * (ws + _PAD + 1) * cin4 * in_bytes        # scratch halo rows
             + 2 * 9 * cin4 * cout4 * in_bytes)             # weights (2 buffers)
    t_budget = max(int((budget_bytes - fixed) // per_row), 1)
    strips_wanted = max(1, -(-_MIN_GRID_STEPS // max(n_batch, 1)))
    t_steps = max(1, -(-hs // strips_wanted))               # cdiv
    return int(max(1, min(hs, t_budget, t_steps)))


def fused_downsample_s2d(x_s2d, w_folded):
    """x_s2d: (N, Hs, Ws, Cin4); w_folded: (9, Cin4, Cout4)
    -> (N, Hs, Ws, Cout4) float32, channels in PixelUnshuffle order."""
    n, hs, ws, cin4 = x_s2d.shape
    cout4 = w_folded.shape[-1]
    in_bytes = x_s2d.dtype.itemsize

    vmem_limit, budget = _vmem_policy()
    ths = _pick_strip_rows(hs, ws, cin4, cout4, in_bytes, n, budget)
    n_strips = pl.cdiv(hs, ths)
    need_row_mask = (hs % ths) != 0

    flops = 2 * 9 * cin4 * cout4 * hs * ws * n
    bytes_accessed = (n * hs * ws * cin4 * in_bytes
                      + 9 * cin4 * cout4 * in_bytes
                      + n * hs * ws * cout4 * 4)

    return pl.pallas_call(
        _make_kernel(hs, ths, need_row_mask),
        out_shape=jax.ShapeDtypeStruct((n, hs, ws, cout4), jnp.float32),
        grid_spec=pltpu.PrefetchScalarGridSpec(
            num_scalar_prefetch=0,
            grid=(n, n_strips),
            in_specs=[
                # main strip
                pl.BlockSpec((None, ths, ws, cin4),
                             lambda b, i: (b, i, 0, 0)),
                # one-row halo above (clamped; zeroed in-kernel at image top)
                pl.BlockSpec((None, 1, ws, cin4),
                             lambda b, i: (b, jnp.maximum(i * ths - 1, 0), 0, 0)),
                # one-row halo below (clamped; zeroed in-kernel at image bottom)
                pl.BlockSpec((None, 1, ws, cin4),
                             lambda b, i: (b, jnp.minimum((i + 1) * ths, hs - 1),
                                           0, 0)),
                # folded weights, constant index map -> fetched once
                pl.BlockSpec((9, cin4, cout4), lambda b, i: (0, 0, 0)),
            ],
            out_specs=pl.BlockSpec((None, ths, ws, cout4),
                                   lambda b, i: (b, i, 0, 0)),
            scratch_shapes=[
                pltpu.VMEM((ths + 2, ws + _PAD + 1, cin4), x_s2d.dtype),
            ],
        ),
        compiler_params=pltpu.CompilerParams(
            dimension_semantics=("parallel", "parallel"),
            vmem_limit_bytes=vmem_limit),
        cost_estimate=pl.CostEstimate(flops=flops, transcendentals=0,
                                      bytes_accessed=bytes_accessed),
    )(x_s2d, x_s2d, x_s2d, w_folded)


# ----------------------------------------------------------------------------
# Module wrapper (PyTorch-compatible NCHW in / NCHW out).
# ----------------------------------------------------------------------------
class DownsamplePallas:
    """Downsample(n_feat): Conv2d(n_feat, n_feat//2, 3, 1, 1, bias=False)
    followed by PixelUnshuffle(2)."""

    def __init__(self, n_feat, key, compute_dtype=jnp.bfloat16):
        cout = n_feat // 2
        # TODO(synk): deterministic normal*0.1 init; PyTorch's kaiming_uniform
        # Conv2d init is not replicated (load real weights for parity).
        self.w_oihw = jax.random.normal(
            key, (cout, n_feat, 3, 3), dtype=jnp.float32) * 0.1
        self.w_folded = fold_conv_unshuffle_weights(self.w_oihw)   # (9, 4Cin, 4Cout)
        self.n_feat = n_feat
        # bf16 by default (memory-bound op); kernel accumulates and stores f32.
        self.compute_dtype = compute_dtype

    def __call__(self, x_nchw):
        n, c, h, w = x_nchw.shape
        assert c == self.n_feat and h % 2 == 0 and w % 2 == 0
        cdt = self.compute_dtype if self.compute_dtype is not None else x_nchw.dtype
        x_s2d = space_to_depth_nchw(x_nchw).astype(cdt)   # (N, H/2, W/2, 4*Cin)
        wk = self.w_folded.astype(cdt)
        y = fused_downsample_s2d(x_s2d, wk)               # (N, H/2, W/2, 2*n_feat) f32
        # NCHW output to match the PyTorch contract (drop in an NHWC pipeline).
        return jnp.transpose(y, (0, 3, 1, 2)).astype(x_nchw.dtype)


# ----------------------------------------------------------------------------
# Pure-JAX reference (conv -> PixelUnshuffle) for a numerical self-check.
# ----------------------------------------------------------------------------
def _reference_downsample(x_nchw, w_oihw):
    y = jax.lax.conv_general_dilated(
        x_nchw, w_oihw, window_strides=(1, 1), padding=((1, 1), (1, 1)),
        dimension_numbers=("NCHW", "OIHW", "NCHW"))
    n, c, h, w = y.shape
    y = y.reshape(n, c, h // 2, 2, w // 2, 2)
    y = jnp.transpose(y, (0, 1, 3, 5, 2, 4))           # n, c, r, s, h2, w2
    return y.reshape(n, c * 4, h // 2, w // 2)


if __name__ == "__main__":
    key = jax.random.PRNGKey(0)
    k_x, k_w = jax.random.split(key)

    N, n_feat, H, W = 2, 4, 16, 16
    x = jax.random.normal(k_x, (N, n_feat, H, W), dtype=jnp.float32)

    mod = DownsamplePallas(n_feat, k_w)
    fwd = jax.jit(lambda inp: mod(inp))
    out = jax.block_until_ready(fwd(x))

    assert out.shape == (N, 2 * n_feat, H // 2, W // 2), out.shape

    ref = _reference_downsample(x, mod.w_oihw)
    max_err = float(jnp.max(jnp.abs(out - ref)))
    # bf16 operands + f32 accumulation vs f32 reference.
    assert jnp.allclose(out, ref, atol=5e-2, rtol=5e-2), f"max err {max_err}"

    print("KERNEL_OK")
</pallas_src>

<mosaic_0001>
module attributes {stable_mosaic.version = 11 : i64} {
  func.func @kernel(%arg0: i32, %arg1: i32, %arg2: memref<1x2x8x16xbf16, #tpu.memory_space<vmem>>, %arg3: memref<1x1x8x16xbf16, #tpu.memory_space<vmem>>, %arg4: memref<1x1x8x16xbf16, #tpu.memory_space<vmem>>, %arg5: memref<9x16x8xbf16, #tpu.memory_space<vmem>>, %arg6: memref<1x2x8x8xf32, #tpu.memory_space<vmem>>, %arg7: memref<4x25x16xbf16, #tpu.memory_space<vmem>>) attributes {dimension_semantics = [#tpu.dimension_semantics<parallel>, #tpu.dimension_semantics<parallel>], iteration_bounds = array<i64: 2, 4>, scalar_prefetch = 0 : i64, scratch_operands = 1 : i64, tpu.core_type = #tpu.core_type<tc>, window_params = [{transform_indices = @transform_0, window_bounds = array<i64: 1, 2, 8, 16>}, {transform_indices = @transform_1, window_bounds = array<i64: 1, 1, 8, 16>}, {transform_indices = @transform_2, window_bounds = array<i64: 1, 1, 8, 16>}, {pipeline_mode = #tpu.pipeline_mode<synchronous>, transform_indices = @transform_3, window_bounds = array<i64: 9, 16, 8>}, {transform_indices = @transform_4, window_bounds = array<i64: 1, 2, 8, 8>}]} {
    %c0 = arith.constant 0 : index
    %c0_0 = arith.constant 0 : index
    %c0_1 = arith.constant 0 : index
    %c0_2 = arith.constant 0 : index
    %0 = vector.load %arg2[%c0, %c0_0, %c0_1, %c0_2] : memref<1x2x8x16xbf16, #tpu.memory_space<vmem>>, vector<1x2x8x16xbf16>
    %1 = vector.shape_cast %0 : vector<1x2x8x16xbf16> to vector<2x8x16xbf16>
    %c1 = arith.constant 1 : index
    %c16 = arith.constant 16 : index
    %c0_3 = arith.constant 0 : index
    %2 = vector.load %arg7[%c1, %c16, %c0_3] : memref<4x25x16xbf16, #tpu.memory_space<vmem>>, vector<2x8x16xbf16>
    tpu.vector_store %arg7[%c1, %c16, %c0_3], %1 {strides = array<i32>} : memref<4x25x16xbf16, #tpu.memory_space<vmem>>, vector<2x8x16xbf16>,
    %c0_4 = arith.constant 0 : index
    %c0_5 = arith.constant 0 : index
    %c0_6 = arith.constant 0 : index
    %c0_7 = arith.constant 0 : index
    %3 = vector.load %arg3[%c0_4, %c0_5, %c0_6, %c0_7] : memref<1x1x8x16xbf16, #tpu.memory_space<vmem>>, vector<1x1x8x16xbf16>
    %4 = vector.shape_cast %3 : vector<1x1x8x16xbf16> to vector<1x8x16xbf16>
    %c0_i32 = arith.constant 0 : i32
    %5 = arith.cmpi sgt, %arg1, %c0_i32 : i32
    %6 = arith.extui %5 : i1 to i32
    %7 = arith.sitofp %6 : i32 to f32
    %8 = arith.truncf %7 : f32 to bf16
    %9 = vector.broadcast %8 : bf16 to vector<1x8x16xbf16>
    %10 = arith.mulf %4, %9 : vector<1x8x16xbf16>
    %c0_8 = arith.constant 0 : index
    %c16_9 = arith.constant 16 : index
    %c0_10 = arith.constant 0 : index
    %11 = vector.load %arg7[%c0_8, %c16_9, %c0_10] : memref<4x25x16xbf16, #tpu.memory_space<vmem>>, vector<1x8x16xbf16>
    tpu.vector_store %arg7[%c0_8, %c16_9, %c0_10], %10 {strides = array<i32>} : memref<4x25x16xbf16, #tpu.memory_space<vmem>>, vector<1x8x16xbf16>,
    %c0_11 = arith.constant 0 : index
    %c0_12 = arith.constant 0 : index
    %c0_13 = arith.constant 0 : index
    %c0_14 = arith.constant 0 : index
    %12 = vector.load %arg4[%c0_11, %c0_12, %c0_13, %c0_14] : memref<1x1x8x16xbf16, #tpu.memory_space<vmem>>, vector<1x1x8x16xbf16>
    %13 = vector.shape_cast %12 : vector<1x1x8x16xbf16> to vector<1x8x16xbf16>
    %c1_i32 = arith.constant 1 : i32
    %14 = arith.addi %arg1, %c1_i32 : i32
    %c2_i32 = arith.constant 2 : i32
    %15 = arith.muli %14, %c2_i32 : i32
    %c8_i32 = arith.constant 8 : i32
    %16 = arith.cmpi slt, %15, %c8_i32 : i32
    %17 = arith.extui %16 : i1 to i32
    %18 = arith.sitofp %17 : i32 to f32
    %19 = arith.truncf %18 : f32 to bf16
    %20 = vector.broadcast %19 : bf16 to vector<1x8x16xbf16>
    %21 = arith.mulf %13, %20 : vector<1x8x16xbf16>
    %c3 = arith.constant 3 : index
    %c16_15 = arith.constant 16 : index
    %c0_16 = arith.constant 0 : index
    %22 = vector.load %arg7[%c3, %c16_15, %c0_16] : memref<4x25x16xbf16, #tpu.memory_space<vmem>>, vector<1x8x16xbf16>
    tpu.vector_store %arg7[%c3, %c16_15, %c0_16], %21 {strides = array<i32>} : memref<4x25x16xbf16, #tpu.memory_space<vmem>>, vector<1x8x16xbf16>,
    %cst = arith.constant 0.000000e+00 : bf16
    %23 = vector.broadcast %cst : bf16 to vector<4x1x16xbf16>
    %c0_17 = arith.constant 0 : index
    %c15 = arith.constant 15 : index
    %c0_18 = arith.constant 0 : index
    %24 = vector.load %arg7[%c0_17, %c15, %c0_18] : memref<4x25x16xbf16, #tpu.memory_space<vmem>>, vector<4x1x16xbf16>
    tpu.vector_store %arg7[%c0_17, %c15, %c0_18], %23 {strides = array<i32>} : memref<4x25x16xbf16, #tpu.memory_space<vmem>>, vector<4x1x16xbf16>,
    %c0_19 = arith.constant 0 : index
    %c24 = arith.constant 24 : index
    %c0_20 = arith.constant 0 : index
    %25 = vector.load %arg7[%c0_19, %c24, %c0_20] : memref<4x25x16xbf16, #tpu.memory_space<vmem>>, vector<4x1x16xbf16>
    tpu.vector_store %arg7[%c0_19, %c24, %c0_20], %23 {strides = array<i32>} : memref<4x25x16xbf16, #tpu.memory_space<vmem>>, vector<4x1x16xbf16>,
    %c0_21 = arith.constant 0 : index
    %c15_22 = arith.constant 15 : index
    %c0_23 = arith.constant 0 : index
    %26 = vector.load %arg7[%c0_21, %c15_22, %c0_23] : memref<4x25x16xbf16, #tpu.memory_space<vmem>>, vector<2x8x16xbf16>
    %c0_24 = arith.constant 0 : index
    %c0_25 = arith.constant 0 : index
    %c0_26 = arith.constant 0 : index
    %27 = vector.load %arg5[%c0_24, %c0_25, %c0_26] : memref<9x16x8xbf16, #tpu.memory_space<vmem>>, vector<1x16x8xbf16>
    %28 = vector.shape_cast %27 : vector<1x16x8xbf16> to vector<16x8xbf16>
    %cst_27 = arith.constant dense<0.000000e+00> : vector<2x8x8xf32>
    %29 = tpu.matmul %26, %28, %cst_27 {dimension_numbers = #tpu.dot_dimension_numbers<[2], [0], [0, 1], [1], [0, 0, 0, 1, 1, 1], [], []>} : vector<2x8x16xbf16>, vector<16x8xbf16>, vector<2x8x8xf32> -> vector<2x8x8xf32>
    %c0_28 = arith.constant 0 : index
    %c16_29 = arith.constant 16 : index
    %c0_30 = arith.constant 0 : index
    %30 = vector.load %arg7[%c0_28, %c16_29, %c0_30] : memref<4x25x16xbf16, #tpu.memory_space<vmem>>, vector<2x8x16xbf16>
    %c1_31 = arith.constant 1 : index
    %c0_32 = arith.constant 0 : index
    %c0_33 = arith.constant 0 : index
    %31 = vector.load %arg5[%c1_31, %c0_32, %c0_33] : memref<9x16x8xbf16, #tpu.memory_space<vmem>>, vector<1x16x8xbf16>
    %32 = vector.shape_cast %31 : vector<1x16x8xbf16> to vector<16x8xbf16>
    %cst_34 = arith.constant dense<0.000000e+00> : vector<2x8x8xf32>
    %33 = tpu.matmul %30, %32, %cst_34 {dimension_numbers = #tpu.dot_dimension_numbers<[2], [0], [0, 1], [1], [0, 0, 0, 1, 1, 1], [], []>} : vector<2x8x16xbf16>, vector<16x8xbf16>, vector<2x8x8xf32> -> vector<2x8x8xf32>
    %34 = arith.addf %29, %33 : vector<2x8x8xf32>
    %c0_35 = arith.constant 0 : index
    %c17 = arith.constant 17 : index
    %c0_36 = arith.constant 0 : index
    %35 = vector.load %arg7[%c0_35, %c17, %c0_36] : memref<4x25x16xbf16, #tpu.memory_space<vmem>>, vector<2x8x16xbf16>
    %c2 = arith.constant 2 : index
    %c0_37 = arith.constant 0 : index
    %c0_38 = arith.constant 0 : index
    %36 = vector.load %arg5[%c2, %c0_37, %c0_38] : memref<9x16x8xbf16, #tpu.memory_space<vmem>>, vector<1x16x8xbf16>
    %37 = vector.shape_cast %36 : vector<1x16x8xbf16> to vector<16x8xbf16>
    %cst_39 = arith.constant dense<0.000000e+00> : vector<2x8x8xf32>
    %38 = tpu.matmul %35, %37, %cst_39 {dimension_numbers = #tpu.dot_dimension_numbers<[2], [0], [0, 1], [1], [0, 0, 0, 1, 1, 1], [], []>} : vector<2x8x16xbf16>, vector<16x8xbf16>, vector<2x8x8xf32> -> vector<2x8x8xf32>
    %39 = arith.addf %34, %38 : vector<2x8x8xf32>
    %c1_40 = arith.constant 1 : index
    %c15_41 = arith.constant 15 : index
    %c0_42 = arith.constant 0 : index
    %40 = vector.load %arg7[%c1_40, %c15_41, %c0_42] : memref<4x25x16xbf16, #tpu.memory_space<vmem>>, vector<2x8x16xbf16>
    %c3_43 = arith.constant 3 : index
    %c0_44 = arith.constant 0 : index
    %c0_45 = arith.constant 0 : index
    %41 = vector.load %arg5[%c3_43, %c0_44, %c0_45] : memref<9x16x8xbf16, #tpu.memory_space<vmem>>, vector<1x16x8xbf16>
    %42 = vector.shape_cast %41 : vector<1x16x8xbf16> to vector<16x8xbf16>
    %cst_46 = arith.constant dense<0.000000e+00> : vector<2x8x8xf32>
    %43 = tpu.matmul %40, %42, %cst_46 {dimension_numbers = #tpu.dot_dimension_numbers<[2], [0], [0, 1], [1], [0, 0, 0, 1, 1, 1], [], []>} : vector<2x8x16xbf16>, vector<16x8xbf16>, vector<2x8x8xf32> -> vector<2x8x8xf32>
    %44 = arith.addf %39, %43 : vector<2x8x8xf32>
    %c1_47 = arith.constant 1 : index
    %c16_48 = arith.constant 16 : index
    %c0_49 = arith.constant 0 : index
    %45 = vector.load %arg7[%c1_47, %c16_48, %c0_49] : memref<4x25x16xbf16, #tpu.memory_space<vmem>>, vector<2x8x16xbf16>
    %c4 = arith.constant 4 : index
    %c0_50 = arith.constant 0 : index
    %c0_51 = arith.constant 0 : index
    %46 = vector.load %arg5[%c4, %c0_50, %c0_51] : memref<9x16x8xbf16, #tpu.memory_space<vmem>>, vector<1x16x8xbf16>
    %47 = vector.shape_cast %46 : vector<1x16x8xbf16> to vector<16x8xbf16>
    %cst_52 = arith.constant dense<0.000000e+00> : vector<2x8x8xf32>
    %48 = tpu.matmul %45, %47, %cst_52 {dimension_numbers = #tpu.dot_dimension_numbers<[2], [0], [0, 1], [1], [0, 0, 0, 1, 1, 1], [], []>} : vector<2x8x16xbf16>, vector<16x8xbf16>, vector<2x8x8xf32> -> vector<2x8x8xf32>
    %49 = arith.addf %44, %48 : vector<2x8x8xf32>
    %c1_53 = arith.constant 1 : index
    %c17_54 = arith.constant 17 : index
    %c0_55 = arith.constant 0 : index
    %50 = vector.load %arg7[%c1_53, %c17_54, %c0_55] : memref<4x25x16xbf16, #tpu.memory_space<vmem>>, vector<2x8x16xbf16>
    %c5 = arith.constant 5 : index
    %c0_56 = arith.constant 0 : index
    %c0_57 = arith.constant 0 : index
    %51 = vector.load %arg5[%c5, %c0_56, %c0_57] : memref<9x16x8xbf16, #tpu.memory_space<vmem>>, vector<1x16x8xbf16>
    %52 = vector.shape_cast %51 : vector<1x16x8xbf16> to vector<16x8xbf16>
    %cst_58 = arith.constant dense<0.000000e+00> : vector<2x8x8xf32>
    %53 = tpu.matmul %50, %52, %cst_58 {dimension_numbers = #tpu.dot_dimension_numbers<[2], [0], [0, 1], [1], [0, 0, 0, 1, 1, 1], [], []>} : vector<2x8x16xbf16>, vector<16x8xbf16>, vector<2x8x8xf32> -> vector<2x8x8xf32>
    %54 = arith.addf %49, %53 : vector<2x8x8xf32>
    %c2_59 = arith.constant 2 : index
    %c15_60 = arith.constant 15 : index
    %c0_61 = arith.constant 0 : index
    %55 = vector.load %arg7[%c2_59, %c15_60, %c0_61] : memref<4x25x16xbf16, #tpu.memory_space<vmem>>, vector<2x8x16xbf16>
    %c6 = arith.constant 6 : index
    %c0_62 = arith.constant 0 : index
    %c0_63 = arith.constant 0 : index
    %56 = vector.load %arg5[%c6, %c0_62, %c0_63] : memref<9x16x8xbf16, #tpu.memory_space<vmem>>, vector<1x16x8xbf16>
    %57 = vector.shape_cast %56 : vector<1x16x8xbf16> to vector<16x8xbf16>
    %cst_64 = arith.constant dense<0.000000e+00> : vector<2x8x8xf32>
    %58 = tpu.matmul %55, %57, %cst_64 {dimension_numbers = #tpu.dot_dimension_numbers<[2], [0], [0, 1], [1], [0, 0, 0, 1, 1, 1], [], []>} : vector<2x8x16xbf16>, vector<16x8xbf16>, vector<2x8x8xf32> -> vector<2x8x8xf32>
    %59 = arith.addf %54, %58 : vector<2x8x8xf32>
    %c2_65 = arith.constant 2 : index
    %c16_66 = arith.constant 16 : index
    %c0_67 = arith.constant 0 : index
    %60 = vector.load %arg7[%c2_65, %c16_66, %c0_67] : memref<4x25x16xbf16, #tpu.memory_space<vmem>>, vector<2x8x16xbf16>
    %c7 = arith.constant 7 : index
    %c0_68 = arith.constant 0 : index
    %c0_69 = arith.constant 0 : index
    %61 = vector.load %arg5[%c7, %c0_68, %c0_69] : memref<9x16x8xbf16, #tpu.memory_space<vmem>>, vector<1x16x8xbf16>
    %62 = vector.shape_cast %61 : vector<1x16x8xbf16> to vector<16x8xbf16>
    %cst_70 = arith.constant dense<0.000000e+00> : vector<2x8x8xf32>
    %63 = tpu.matmul %60, %62, %cst_70 {dimension_numbers = #tpu.dot_dimension_numbers<[2], [0], [0, 1], [1], [0, 0, 0, 1, 1, 1], [], []>} : vector<2x8x16xbf16>, vector<16x8xbf16>, vector<2x8x8xf32> -> vector<2x8x8xf32>
    %64 = arith.addf %59, %63 : vector<2x8x8xf32>
    %c2_71 = arith.constant 2 : index
    %c17_72 = arith.constant 17 : index
    %c0_73 = arith.constant 0 : index
    %65 = vector.load %arg7[%c2_71, %c17_72, %c0_73] : memref<4x25x16xbf16, #tpu.memory_space<vmem>>, vector<2x8x16xbf16>
    %c8 = arith.constant 8 : index
    %c0_74 = arith.constant 0 : index
    %c0_75 = arith.constant 0 : index
    %66 = vector.load %arg5[%c8, %c0_74, %c0_75] : memref<9x16x8xbf16, #tpu.memory_space<vmem>>, vector<1x16x8xbf16>
    %67 = vector.shape_cast %66 : vector<1x16x8xbf16> to vector<16x8xbf16>
    %cst_76 = arith.constant dense<0.000000e+00> : vector<2x8x8xf32>
    %68 = tpu.matmul %65, %67, %cst_76 {dimension_numbers = #tpu.dot_dimension_numbers<[2], [0], [0, 1], [1], [0, 0, 0, 1, 1, 1], [], []>} : vector<2x8x16xbf16>, vector<16x8xbf16>, vector<2x8x8xf32> -> vector<2x8x8xf32>
    %69 = arith.addf %64, %68 : vector<2x8x8xf32>
    %c0_77 = arith.constant 0 : index
    %c0_78 = arith.constant 0 : index
    %c0_79 = arith.constant 0 : index
    %c0_80 = arith.constant 0 : index
    %70 = vector.load %arg6[%c0_77, %c0_78, %c0_79, %c0_80] : memref<1x2x8x8xf32, #tpu.memory_space<vmem>>, vector<1x2x8x8xf32>
    %71 = vector.shape_cast %70 : vector<1x2x8x8xf32> to vector<2x8x8xf32>
    %72 = vector.shape_cast %69 : vector<2x8x8xf32> to vector<1x2x8x8xf32>
    tpu.vector_store %arg6[%c0_77, %c0_78, %c0_79, %c0_80], %72 {strides = array<i32>} : memref<1x2x8x8xf32, #tpu.memory_space<vmem>>, vector<1x2x8x8xf32>,
    return
  }
  func.func @transform_0(%arg0: i32, %arg1: i32) -> (i32, i32, i32, i32) {
    %c0_i32 = arith.constant 0 : i32
    %c0_i32_0 = arith.constant 0 : i32
    %c0_i32_1 = arith.constant 0 : i32
    return %arg0, %arg1, %c0_i32, %c0_i32_0 : i32, i32, i32, i32
  }
  func.func @transform_1(%arg0: i32, %arg1: i32) -> (i32, i32, i32, i32) {
    %c2_i32 = arith.constant 2 : i32
    %0 = arith.muli %arg1, %c2_i32 : i32
    %c1_i32 = arith.constant 1 : i32
    %1 = arith.subi %0, %c1_i32 : i32
    %c0_i32 = arith.constant 0 : i32
    %2 = arith.maxsi %1, %c0_i32 : i32
    %c0_i32_0 = arith.constant 0 : i32
    %c0_i32_1 = arith.constant 0 : i32
    %c0_i32_2 = arith.constant 0 : i32
    return %arg0, %2, %c0_i32_0, %c0_i32_1 : i32, i32, i32, i32
  }
  func.func @transform_2(%arg0: i32, %arg1: i32) -> (i32, i32, i32, i32) {
    %c1_i32 = arith.constant 1 : i32
    %0 = arith.addi %arg1, %c1_i32 : i32
    %c2_i32 = arith.constant 2 : i32
    %1 = arith.muli %0, %c2_i32 : i32
    %c7_i32 = arith.constant 7 : i32
    %2 = arith.minsi %1, %c7_i32 : i32
    %c0_i32 = arith.constant 0 : i32
    %c0_i32_0 = arith.constant 0 : i32
    %c0_i32_1 = arith.constant 0 : i32
    return %arg0, %2, %c0_i32, %c0_i32_0 : i32, i32, i32, i32
  }
  func.func @transform_3(%arg0: i32, %arg1: i32) -> (i32, i32, i32) {
    %c0_i32 = arith.constant 0 : i32
    %c0_i32_0 = arith.constant 0 : i32
    %c0_i32_1 = arith.constant 0 : i32
    %c0_i32_2 = arith.constant 0 : i32
    return %c0_i32, %c0_i32_0, %c0_i32_1 : i32, i32, i32
  }
  func.func @transform_4(%arg0: i32, %arg1: i32) -> (i32, i32, i32, i32) {
    %c0_i32 = arith.constant 0 : i32
    %c0_i32_0 = arith.constant 0 : i32
    %c0_i32_1 = arith.constant 0 : i32
    return %arg0, %arg1, %c0_i32, %c0_i32_0 : i32, i32, i32, i32
  }
}

</mosaic_0001>

<llo_original>
// kernel: _lambda_.1
$region0: #{_lambda_.1}
  #allocation0 [shape = 'u32[]', space=smem, size = 0x4, offset = 0x4, fixed_abs, tag = 'smem constant byte address 0x4 - core index']
  #allocation1 [shape = 'u32[144,128]{1,0:T(1,128)}', space=vmem, size = 0x12000, scoped, tag = 'internal scratch']
  #allocation2 [shape = 'bf16[4,25,16]{2,1,0:T(8,128)(2,1)}', space=vmem, size = 0x8000, scoped, tag = 'scratch operand']
  %s0 = inlined_call_operand.vmem [shape: bf16[2,8,8,16], index: 0, kind: input, shape index: {}, may-alias: {0,1,2}]
  %s1 = inlined_call_operand.vmem [shape: bf16[2,8,8,16], index: 1, kind: input, shape index: {}, may-alias: {0,1,2}]
  %s2 = inlined_call_operand.vmem [shape: bf16[2,8,8,16], index: 2, kind: input, shape index: {}, may-alias: {0,1,2}]
  %s3 = inlined_call_operand.vmem [shape: bf16[9,16,8], index: 3, kind: input, shape index: {}]
  %s4 = inlined_call_operand.vmem [shape: f32[2,8,8,8], index: 4, kind: output, shape index: {}]
  %s5 = sld [smem:[#allocation0]]
  $region49: #{_lambda_.1} parent=0
    _
  %s7 = ssub.s32 1, %s5
  %s8 = scalar_select 0, %s7, %s5
  loop: start=0, step=1, limit=10
  $region2: #{_lambda_.1} parent=0 // loop_pre_header
    _
  $region3: #{_lambda_.1} parent=0 // loop_header
    %s10 = sphi 0, %s14
    %p11 = scmp.ge.s32.totalorder %s10, 10
    %s17 = sphi 0, %s29
    %s18 = sphi 0, %s25
    %s19 = sphi 0, %s17
    %s20 = sphi 0, %s18
    %s21 = sphi 0, %s19
    %s22 = sphi 0, %s20
    %s34 = sphi 0, %s36
    %s37 = sphi 0, %s34
    %s38 = sphi 0, %s37
    %s54 = sphi 0, %s38
    %s70 = sphi 0, %s72
    %s73 = sphi 0, %s70
    %s74 = sphi 0, %s73
    %s90 = sphi 0, %s74
    %s106 = sphi 0, %s108
    %s109 = sphi 0, %s106
    %s110 = sphi 0, %s109
    %s126 = sphi 0, %s110
    %s130 = sphi 0, %s130
    %s132 = sphi 0, %s130
    %s133 = sphi 0, %s132
    %s147 = sphi 0, %s133
    %s155 = sphi 0, %s157
    %s158 = sphi 0, %s155
    %s159 = sphi 0, %s158
    %s175 = sphi 0, %s159
  $region4: #{_lambda_.1} parent=0 // loop_header_branch
    %13 = sbr.rel (%p11) target = $region8
  $region5: #{_lambda_.1} parent=0 // loop_body
    %s15 = ssub.s32 %s10, 1
    %s16 = ssub.s32 %s10, 2
    %s23 = sadd.s32 1, %s18
    %p24 = scmp.ge.s32.totalorder %s23, 4
    %s25 = scalar_select %p24, 0, %s23
    %s26 = sadd.s32 1, %s17
    %s27 = scalar_select %p24, %s26, %s17
    %p28 = scmp.ge.s32.totalorder %s27, 2
    %s29 = scalar_select %p28, 0, %s27
    %s30 = ssub.s32 %s17, %s29
    %s31 = ssub.s32 %s18, %s25
    %s32 = sor.u32 %s30, %s31
    %p33 = scmp.eq.s32.totalorder %s32, 0
    %s35 = sadd.s32 %s34, 1
    %s36 = scalar_select %p33, %s34, %s35
    %p39 = pneg %p33
    %p40 = scmp.eq.s32.totalorder %s10, 7
    %p41 = por %p39, %p40
    %p42 = scmp.ne.s32.totalorder %s34, %s37
    %p43 = scmp.eq.s32.totalorder %s10, 0
    %p44 = por %p42, %p43
    %p45 = scmp.ne.s32.totalorder %s34, %s37
    %p46 = scmp.eq.s32.totalorder %s15, 7
    %p47 = por %p45, %p46
    %p48 = scmp.ne.s32.totalorder %s37, %s38
    %p49 = scmp.eq.s32.totalorder %s15, 0
    %p50 = por %p48, %p49
    %p51 = scmp.ne.s32.totalorder %s37, %s38
    %p52 = scmp.eq.s32.totalorder %s16, 7
    %p53 = por %p51, %p52
    %p55 = scmp.ne.s32.totalorder %s38, %s54
    %p56 = scmp.eq.s32.totalorder %s16, 0
    %p57 = por %p55, %p56
    %s58 = smul.u32 %s18, 2
    %s59 = ssub.s32 %s58, 1
    %p60 = scmp.gt.s32.totalorder %s59, 0
    %s61 = scalar_select %p60, %s59, 0
    %s62 = smul.u32 %s25, 2
    %s63 = ssub.s32 %s62, 1
    %p64 = scmp.gt.s32.totalorder %s63, 0
    %s65 = scalar_select %p64, %s63, 0
    %s66 = ssub.s32 %s17, %s29
    %s67 = ssub.s32 %s61, %s65
    %s68 = sor.u32 %s66, %s67
    %p69 = scmp.eq.s32.totalorder %s68, 0
    %s71 = sadd.s32 %s70, 1
    %s72 = scalar_select %p69, %s70, %s71
    %p75 = pneg %p69
    %p76 = scmp.eq.s32.totalorder %s10, 7
    %p77 = por %p75, %p76
    %p78 = scmp.ne.s32.totalorder %s70, %s73
    %p79 = scmp.eq.s32.totalorder %s10, 0
    %p80 = por %p78, %p79
    %p81 = scmp.ne.s32.totalorder %s70, %s73
    %p82 = scmp.eq.s32.totalorder %s15, 7
    %p83 = por %p81, %p82
    %p84 = scmp.ne.s32.totalorder %s73, %s74
    %p85 = scmp.eq.s32.totalorder %s15, 0
    %p86 = por %p84, %p85
    %p87 = scmp.ne.s32.totalorder %s73, %s74
    %p88 = scmp.eq.s32.totalorder %s16, 7
    %p89 = por %p87, %p88
    %p91 = scmp.ne.s32.totalorder %s74, %s90
    %p92 = scmp.eq.s32.totalorder %s16, 0
    %p93 = por %p91, %p92
    %s94 = sadd.s32 %s18, 1
    %s95 = smul.u32 %s94, 2
    %p96 = scmp.lt.s32.totalorder %s95, 7
    %s97 = scalar_select %p96, %s95, 7
    %s98 = sadd.s32 %s25, 1
    %s99 = smul.u32 %s98, 2
    %p100 = scmp.lt.s32.totalorder %s99, 7
    %s101 = scalar_select %p100, %s99, 7
    %s102 = ssub.s32 %s17, %s29
    %s103 = ssub.s32 %s97, %s101
    %s104 = sor.u32 %s102, %s103
    %p105 = scmp.eq.s32.totalorder %s104, 0
    %s107 = sadd.s32 %s106, 1
    %s108 = scalar_select %p105, %s106, %s107
    %p111 = pneg %p105
    %p112 = scmp.eq.s32.totalorder %s10, 7
    %p113 = por %p111, %p112
    %p114 = scmp.ne.s32.totalorder %s106, %s109
    %p115 = scmp.eq.s32.totalorder %s10, 0
    %p116 = por %p114, %p115
    %p117 = scmp.ne.s32.totalorder %s106, %s109
    %p118 = scmp.eq.s32.totalorder %s15, 7
    %p119 = por %p117, %p118
    %p120 = scmp.ne.s32.totalorder %s109, %s110
    %p121 = scmp.eq.s32.totalorder %s15, 0
    %p122 = por %p120, %p121
    %p123 = scmp.ne.s32.totalorder %s109, %s110
    %p124 = scmp.eq.s32.totalorder %s16, 7
    %p125 = por %p123, %p124
    %p127 = scmp.ne.s32.totalorder %s110, %s126
    %p128 = scmp.eq.s32.totalorder %s16, 0
    %p129 = por %p127, %p128
    %s131 = sadd.s32 %s130, 1
    %p134 = scmp.eq.s32.totalorder %s10, 7
    %p135 = scmp.ne.s32.totalorder %s130, %s132
    %p136 = scmp.eq.s32.totalorder %s10, 0
    %p137 = por %p135, %p136
    %p138 = scmp.ne.s32.totalorder %s130, %s132
    %p139 = scmp.eq.s32.totalorder %s15, 7
    %p140 = por %p138, %p139
    %p141 = scmp.ne.s32.totalorder %s132, %s133
    %p142 = scmp.eq.s32.totalorder %s15, 0
    %p143 = por %p141, %p142
    %p144 = scmp.ne.s32.totalorder %s132, %s133
    %p145 = scmp.eq.s32.totalorder %s16, 7
    %p146 = por %p144, %p145
    %p148 = scmp.ne.s32.totalorder %s133, %s147
    %p149 = scmp.eq.s32.totalorder %s16, 0
    %p150 = por %p148, %p149
    %s151 = ssub.s32 %s17, %s29
    %s152 = ssub.s32 %s18, %s25
    %s153 = sor.u32 %s151, %s152
    %p154 = scmp.eq.s32.totalorder %s153, 0
    %s156 = sadd.s32 %s155, 1
    %s157 = scalar_select %p154, %s155, %s156
    %p160 = pneg %p154
    %p161 = scmp.eq.s32.totalorder %s10, 7
    %p162 = por %p160, %p161
    %p163 = scmp.ne.s32.totalorder %s155, %s158
    %p164 = scmp.eq.s32.totalorder %s10, 0
    %p165 = por %p163, %p164
    %p166 = scmp.ne.s32.totalorder %s155, %s158
    %p167 = scmp.eq.s32.totalorder %s15, 7
    %p168 = por %p166, %p167
    %p169 = scmp.ne.s32.totalorder %s158, %s159
    %p170 = scmp.eq.s32.totalorder %s15, 0
    %p171 = por %p169, %p170
    %p172 = scmp.ne.s32.totalorder %s158, %s159
    %p173 = scmp.eq.s32.totalorder %s16, 7
    %p174 = por %p172, %p173
    %p176 = scmp.ne.s32.totalorder %s159, %s175
    %p177 = scmp.eq.s32.totalorder %s16, 0
    %p178 = por %p176, %p177
    %p179 = scmp.le.s32.totalorder 1, %s10
    %p180 = scmp.lt.s32.totalorder %s10, 9
    %p181 = pnand %p179, %p180
    %p182 = pneg %p181
    // Predicated region
    $region9: #{_lambda_.1} parent=5 // pred_check
      _
    $region10: #{_lambda_.1} parent=5 // pred_check_branch
      %184 = sbr.rel (%p181) target = $region12
    $region11: #{_lambda_.1} parent=5 // pred_region
      %s185 = ssub.s32 %s10, 1
      // Predicated region
      $region13: #{_lambda_.1} parent=11 // pred_check
        %p186 = pneg %p143
      $region14: #{_lambda_.1} parent=11 // pred_check_branch
        %188 = sbr.rel (%p186) target = $region16
      $region15: #{_lambda_.1} parent=11 // pred_region
        _
      $region16: #{_lambda_.1} parent=11 // pred_fallthru
        _
    $region12: #{_lambda_.1} parent=5 // pred_fallthru
      _
    %p189 = scmp.lt.s32.totalorder %s10, 8
    // Predicated region
    $region17: #{_lambda_.1} parent=5 // pred_check
      %p190 = pneg %p189
    $region18: #{_lambda_.1} parent=5 // pred_check_branch
      %192 = sbr.rel (%p190) target = $region20
    $region19: #{_lambda_.1} parent=5 // pred_region
      // Predicated region
      $region21: #{_lambda_.1} parent=19 // pred_check
        %p193 = pneg %p44
      $region22: #{_lambda_.1} parent=19 // pred_check_branch
        %195 = sbr.rel (%p193) target = $region24
      $region23: #{_lambda_.1} parent=19 // pred_region
        %s196 = smul.u32 2, %s18
        %p197 = scmp.lt.s32.totalorder %s17, 1
        %s198 = scalar_select %p197, %s17, 1
        %p199 = scmp.lt.s32.totalorder %s196, 7
        %s200 = scalar_select %p199, %s196, 7
        %s201 = smul.addr %s198, 8
        %s202 = sadd.s32 %s200, %s201
        %s203 = smul.addr %s202, 4
        %s204 = scalar_lea.vmem %s0, %s203
        %s205 = smul.u32 2, %s18
      $region24: #{_lambda_.1} parent=19 // pred_fallthru
        _
      // Predicated region
      $region25: #{_lambda_.1} parent=19 // pred_check
        %p206 = pneg %p80
      $region26: #{_lambda_.1} parent=19 // pred_check_branch
        %208 = sbr.rel (%p206) target = $region28
      $region27: #{_lambda_.1} parent=19 // pred_region
        %s209 = smul.u32 %s18, 2
        %s210 = ssub.s32 %s209, 1
        %p211 = scmp.gt.s32.totalorder %s210, 0
        %s212 = scalar_select %p211, %s210, 0
        %p213 = scmp.lt.s32.totalorder %s17, 1
        %s214 = scalar_select %p213, %s17, 1
        %p215 = scmp.lt.s32.totalorder %s212, 7
        %s216 = scalar_select %p215, %s212, 7
        %s217 = smul.addr %s214, 8
        %s218 = sadd.s32 %s216, %s217
        %s219 = smul.addr %s218, 4
        %s220 = scalar_lea.vmem %s1, %s219
        %s221 = smul.u32 %s18, 2
        %s222 = ssub.s32 %s221, 1
        %p223 = scmp.gt.s32.totalorder %s222, 0
        %s224 = scalar_select %p223, %s222, 0
      $region28: #{_lambda_.1} parent=19 // pred_fallthru
        _
      // Predicated region
      $region29: #{_lambda_.1} parent=19 // pred_check
        %p225 = pneg %p116
      $region30: #{_lambda_.1} parent=19 // pred_check_branch
        %227 = sbr.rel (%p225) target = $region32
      $region31: #{_lambda_.1} parent=19 // pred_region
        %s228 = sadd.s32 %s18, 1
        %s229 = smul.u32 %s228, 2
        %p230 = scmp.lt.s32.totalorder %s229, 7
        %s231 = scalar_select %p230, %s229, 7
        %p232 = scmp.lt.s32.totalorder %s17, 1
        %s233 = scalar_select %p232, %s17, 1
        %p234 = scmp.lt.s32.totalorder %s231, 7
        %s235 = scalar_select %p234, %s231, 7
        %s236 = smul.addr %s233, 8
        %s237 = sadd.s32 %s235, %s236
        %s238 = smul.addr %s237, 4
        %s239 = scalar_lea.vmem %s2, %s238
        %s240 = sadd.s32 %s18, 1
        %s241 = smul.u32 %s240, 2
        %p242 = scmp.lt.s32.totalorder %s241, 7
        %s243 = scalar_select %p242, %s241, 7
      $region32: #{_lambda_.1} parent=19 // pred_fallthru
        _
    $region20: #{_lambda_.1} parent=5 // pred_fallthru
      _
    %p244 = scmp.le.s32.totalorder 1, %s10
    %p245 = scmp.lt.s32.totalorder %s10, 9
    %p246 = pnand %p244, %p245
    %p247 = pneg %p246
    // Predicated region
    $region33: #{_lambda_.1} parent=5 // pred_check
      _
    $region34: #{_lambda_.1} parent=5 // pred_check_branch
      %249 = sbr.rel (%p246) target = $region36
    $region35: #{_lambda_.1} parent=5 // pred_region
      %s250 = ssub.s32 %s10, 1
      %s251 = smul.u32 2, %s20
      %p252 = scmp.lt.s32.totalorder %s19, 1
      %s253 = scalar_select %p252, %s19, 1
      %p254 = scmp.lt.s32.totalorder %s251, 7
      %s255 = scalar_select %p254, %s251, 7
      %s256 = smul.addr %s253, 8
      %s257 = sadd.s32 %s255, %s256
      %s258 = smul.addr %s257, 4
      %s259 = scalar_lea.vmem %s0, %s258
      %p260 = pneg %p50
      %p261 = pneg %p47
      %s262 = smul.u32 %s20, 2
      %s263 = ssub.s32 %s262, 1
      %p264 = scmp.gt.s32.totalorder %s263, 0
      %s265 = scalar_select %p264, %s263, 0
      %p266 = scmp.lt.s32.totalorder %s19, 1
      %s267 = scalar_select %p266, %s19, 1
      %p268 = scmp.lt.s32.totalorder %s265, 7
      %s269 = scalar_select %p268, %s265, 7
      %s270 = smul.addr %s267, 8
      %s271 = sadd.s32 %s269, %s270
      %s272 = smul.addr %s271, 4
      %s273 = scalar_lea.vmem %s1, %s272
      %p274 = pneg %p86
      %p275 = pneg %p83
      %s276 = sadd.s32 %s20, 1
      %s277 = smul.u32 %s276, 2
      %p278 = scmp.lt.s32.totalorder %s277, 7
      %s279 = scalar_select %p278, %s277, 7
      %p280 = scmp.lt.s32.totalorder %s19, 1
      %s281 = scalar_select %p280, %s19, 1
      %p282 = scmp.lt.s32.totalorder %s279, 7
      %s283 = scalar_select %p282, %s279, 7
      %s284 = smul.addr %s281, 8
      %s285 = sadd.s32 %s283, %s284
      %s286 = smul.addr %s285, 4
      %s287 = scalar_lea.vmem %s2, %s286
      %p288 = pneg %p122
      %p289 = pneg %p119
      %p290 = pneg %p143
      %p291 = pneg %p140
      %p292 = pneg %p171
      %p293 = pneg %p168
      %s294 = smul.u32 2, %s20
      %p295 = scmp.lt.s32.totalorder %s19, 1
      %s296 = scalar_select %p295, %s19, 1
      %p297 = scmp.lt.s32.totalorder %s294, 7
      %s298 = scalar_select %p297, %s294, 7
      %s299 = smul.addr %s296, 8
      %s300 = sadd.s32 %s298, %s299
      %s301 = smul.addr %s300, 8
      %s302 = scalar_lea.vmem %s4, %s301
      %s303 = smul.u32 2, %s20
      %p304 = scmp.lt.s32.totalorder %s19, 1
      %s305 = scalar_select %p304, %s19, 1
      %p306 = scmp.lt.s32.totalorder %s303, 7
      %s307 = scalar_select %p306, %s303, 7
      %s308 = smul.addr %s305, 8
      %s309 = sadd.s32 %s307, %s308
      %s310 = smul.addr %s309, 4
      %s311 = scalar_lea.vmem %s0, %s310
      %s312 = smul.u32 2, %s20
      %s313 = smul.u32 %s20, 2
      %s314 = ssub.s32 %s313, 1
      %p315 = scmp.gt.s32.totalorder %s314, 0
      %s316 = scalar_select %p315, %s314, 0
      %p317 = scmp.lt.s32.totalorder %s19, 1
      %s318 = scalar_select %p317, %s19, 1
      %p319 = scmp.lt.s32.totalorder %s316, 7
      %s320 = scalar_select %p319, %s316, 7
      %s321 = smul.addr %s318, 8
      %s322 = sadd.s32 %s320, %s321
      %s323 = smul.addr %s322, 4
      %s324 = scalar_lea.vmem %s1, %s323
      %s325 = smul.u32 %s20, 2
      %s326 = ssub.s32 %s325, 1
      %p327 = scmp.gt.s32.totalorder %s326, 0
      %s328 = scalar_select %p327, %s326, 0
      %s329 = sadd.s32 %s20, 1
      %s330 = smul.u32 %s329, 2
      %p331 = scmp.lt.s32.totalorder %s330, 7
      %s332 = scalar_select %p331, %s330, 7
      %p333 = scmp.lt.s32.totalorder %s19, 1
      %s334 = scalar_select %p333, %s19, 1
      %p335 = scmp.lt.s32.totalorder %s332, 7
      %s336 = scalar_select %p335, %s332, 7
      %s337 = smul.addr %s334, 8
      %s338 = sadd.s32 %s336, %s337
      %s339 = smul.addr %s338, 4
      %s340 = scalar_lea.vmem %s2, %s339
      %s341 = sadd.s32 %s20, 1
      %s342 = smul.u32 %s341, 2
      %p343 = scmp.lt.s32.totalorder %s342, 7
      %s344 = scalar_select %p343, %s342, 7
      %s345 = smul.u32 2, %s20
      %p346 = scmp.lt.s32.totalorder %s19, 1
      %s347 = scalar_select %p346, %s19, 1
      %p348 = scmp.lt.s32.totalorder %s345, 7
      %s349 = scalar_select %p348, %s345, 7
      %s350 = smul.addr %s347, 8
      %s351 = sadd.s32 %s349, %s350
      %s352 = smul.addr %s351, 8
      %s353 = scalar_lea.vmem %s4, %s352
      %s354 = smul.u32 2, %s20
      %v356 = vld [vmem:[%s311] sm:$0xf]
      %v357 = vld [vmem:[%s311 + $0x4] sm:$0xf]
      %s358 = scalar_lea.vmem [#allocation2], 16
      %vm359 = vcmask 125952
      %360 = vst.msk [vmem:[%s358 + $0x8] sm:$0xf] %vm359, %v356
      %361 = vst.msk [vmem:[%s358 + $0x18] sm:$0xf] %vm359, %v357
      %v362 = vld [vmem:[%s324] sm:$0xf]
      %p363 = scmp.gt.s32.totalorder %s20, 0
      %s364 = scalar_select %p363, 1, 0
      %s365 = scvt.s32.f32 %s364
      %p367 = scmp.ne.f32.partialorder %s365, %s365
      %s368 = sshrl.u32 %s365, 16
      %s369 = sand.u32 %s368, 1
      %s370 = sadd.s32 32767, %s369
      %s371 = sadd.s32 %s365, %s370
      %s372 = sand.u32 %s371, 4294901760
      %s373 = scalar_select %p367, 2143289344, %s372
      %s375 = sshrl.u32 %s373, 16
      %s376 = sshll.u32 %s375, 16
      %s377 = sor.u32 %s375, %s376
      %v378 = vstv %s377
      %v380 = vmul.bf16 %v362, %v378
      %381 = vst.msk [vmem:[#allocation2 + $0x8] sm:$0xf] %vm359, %v380
      %v382 = vld [vmem:[%s340] sm:$0xf]
      %s383 = sadd.s32 %s20, 1
      %s384 = smul.u32 %s383, 2
      %p385 = scmp.lt.s32.totalorder %s384, 8
      %s386 = scalar_select %p385, 1, 0
      %s387 = scvt.s32.f32 %s386
      %p389 = scmp.ne.f32.partialorder %s387, %s387
      %s390 = sshrl.u32 %s387, 16
      %s391 = sand.u32 %s390, 1
      %s392 = sadd.s32 32767, %s391
      %s393 = sadd.s32 %s387, %s392
      %s394 = sand.u32 %s393, 4294901760
      %s395 = scalar_select %p389, 2143289344, %s394
      %s397 = sshrl.u32 %s395, 16
      %s398 = sshll.u32 %s397, 16
      %s399 = sor.u32 %s397, %s398
      %v400 = vstv %s399
      %v402 = vmul.bf16 %v382, %v400
      %s403 = scalar_lea.vmem [#allocation2], 48
      %404 = vst.msk [vmem:[%s403 + $0x8] sm:$0xf] %vm359, %v402
      %vm405 = vcmask 125955
      %vm406 = vsmask.f32 7950
      %vm407 = vmand %vm405, %vm406
      %v408 = vld [vmem:[#allocation2 + $0x4] sm:$0x8]
      %v409 = vsel %vm407, 0, %v408
      %410 = vst [vmem:[#allocation2 + $0x4] sm:$0x8] %v409
      %v411 = vld [vmem:[#allocation2 + $0x14] sm:$0x8]
      %v412 = vsel %vm407, 0, %v411
      %413 = vst [vmem:[#allocation2 + $0x14] sm:$0x8] %v412
      %v414 = vld [vmem:[#allocation2 + $0x24] sm:$0x8]
      %v415 = vsel %vm407, 0, %v414
      %416 = vst [vmem:[#allocation2 + $0x24] sm:$0x8] %v415
      %v417 = vld [vmem:[#allocation2 + $0x34] sm:$0x8]
      %v418 = vsel %vm407, 0, %v417
      %419 = vst [vmem:[#allocation2 + $0x34] sm:$0x8] %v418
      %vm420 = vcmask 122880
      %vm421 = vsmask.f32 256
      %vm422 = vmand %vm420, %vm421
      %v423 = vld [vmem:[#allocation2 + $0xc] sm:$0x1]
      %v424 = vsel %vm422, 0, %v423
      %425 = vst [vmem:[#allocation2 + $0xc] sm:$0x1] %v424
      %v426 = vld [vmem:[#allocation2 + $0x1c] sm:$0x1]
      %v427 = vsel %vm422, 0, %v426
      %428 = vst [vmem:[#allocation2 + $0x1c] sm:$0x1] %v427
      %v429 = vld [vmem:[#allocation2 + $0x2c] sm:$0x1]
      %v430 = vsel %vm422, 0, %v429
      %431 = vst [vmem:[#allocation2 + $0x2c] sm:$0x1] %v430
      %v432 = vld [vmem:[#allocation2 + $0x3c] sm:$0x1]
      %v433 = vsel %vm422, 0, %v432
      %434 = vst [vmem:[#allocation2 + $0x3c] sm:$0x1] %v433
      %v435 = vld [vmem:[#allocation2 + $0x4] sm:$0x8]
      %v436 = vld [vmem:[#allocation2 + $0x8] sm:$0xf]
      %v437 = vld [vmem:[#allocation2 + $0x14] sm:$0x8]
      %v438 = vld [vmem:[#allocation2 + $0x18] sm:$0xf]
      %v439 = vld [vmem:[%s3] sm:$0xf]
      %v440 = vld [vmem:[%s3 + $0x4] sm:$0xf]
      %s441 = scalar_lea.vmem %s3, 8
      %v442 = vld [vmem:[%s441] sm:$0xf]
      %v443 = vld [vmem:[%s441 + $0x4] sm:$0xf]
      %v446 = vunpack.c.l.b16 %v436
      %v447 = vunpack.c.l.b16 %v438
      %v448 = vpack.c.b16 %v447, %v446
      %v451 = vunpack.c.l.b16 %v442
      %v452 = vunpack.c.l.b16 %v443
      %v453 = vpack.c.b16 %v452, %v451
      %vm455 = vcmask 130048
      %v457 = vsel %vm455, %v448, 0
      %459 = vmatprep.subr.bf16.mxu0 0
      %460 = vmatpush1.bf16.msra.mxu0 %v453
      %461 = vmatprep.subr.bf16.mxu0 0
      %462 = vmatpush1.bf16.msra.mxu0 0
      %463 = vmatprep.subr.bf16.mxu0 0
      %464 = vmatpush1.bf16.msra.mxu0 0
      %465 = vmatprep.subr.bf16.mxu0 0
      %466 = vmatpush1.bf16.msra.mxu0 0
      %467 = vmatprep.subr.bf16.mxu0 0
      %468 = vmatpush1.bf16.msra.mxu0 0
      %469 = vmatprep.subr.bf16.mxu0 0
      %470 = vmatpush1.bf16.msra.mxu0 0
      %471 = vmatprep.subr.bf16.mxu0 0
      %472 = vmatpush1.bf16.msra.mxu0 0
      %473 = vmatprep.subr.bf16.mxu0 0
      %474 = vmatpush1.bf16.msra.mxu0 0
      %475 = vmatprep.subr.bf16.mxu0 0
      %476 = vmatpush1.bf16.msra.mxu0 0
      %477 = vmatprep.subr.bf16.mxu0 0
      %478 = vmatpush1.bf16.msra.mxu0 0
      %479 = vmatprep.subr.bf16.mxu0 0
      %480 = vmatpush1.bf16.msra.mxu0 0
      %481 = vmatprep.subr.bf16.mxu0 0
      %482 = vmatpush1.bf16.msra.mxu0 0
      %483 = vmatprep.subr.bf16.mxu0 0
      %484 = vmatpush1.bf16.msra.mxu0 0
      %485 = vmatprep.subr.bf16.mxu0 0
      %486 = vmatpush1.bf16.msra.mxu0 0
      %487 = vmatprep.subr.bf16.mxu0 0
      %488 = vmatpush1.bf16.msra.mxu0 0
      %489 = vmatprep.subr.bf16.mxu0 0
      %490 = vmatpush1.bf16.msra.mxu0 0
      %491 = vmatprep.mubr.bf16.mxu0 0
      %492 = vmatmul.mubr.bf16.gmra.mrb[0].mxu0 %v457
      %v493 = vpop.f32.mrb[0].mxu0
      %v494 = vadd.f32 0.0, %v493
      %v495 = vpop.f32.mrb[0].mxu0
      %v496 = vpop.f32.mrb[0].mxu0
      %v497 = vadd.f32 0.0, %v496
      %v498 = vpop.f32.mrb[0].mxu0
      %499 = vdwg.mxu0
      %vm500 = vsmask.f32 4368
      %vm501 = vmor %vm421, %vm500
      %v503 = vshrl.u32 %v435, 16
      %v505 = vrot.slane %v503, 7
      %v506 = vrot.slane %v505, 4
      %v508 = vshrl.u32 %v436, 16
      %v510 = vrot.slane %v508, 7
      %v511 = vshll.u32 %v436, 16
      %v513 = vor.u32 %v510, %v511
      %v514 = vsel %vm501, %v506, %v513
      %v516 = vshrl.u32 %v437, 16
      %v518 = vrot.slane %v516, 7
      %v519 = vrot.slane %v518, 4
      %v521 = vshrl.u32 %v438, 16
      %v523 = vrot.slane %v521, 7
      %v524 = vshll.u32 %v438, 16
      %v526 = vor.u32 %v523, %v524
      %v527 = vsel %vm501, %v519, %v526
      %v528 = vunpack.c.l.b16 %v514
      %v529 = vunpack.c.l.b16 %v527
      %v530 = vpack.c.b16 %v529, %v528
      %v533 = vunpack.c.l.b16 %v439
      %v534 = vunpack.c.l.b16 %v440
      %v535 = vpack.c.b16 %v534, %v533
      %v538 = vsel %vm455, %v530, 0
      %540 = vmatprep.subr.bf16.mxu0 0
      %541 = vmatpush1.bf16.msra.mxu0 %v535
      %542 = vmatprep.subr.bf16.mxu0 0
      %543 = vmatpush1.bf16.msra.mxu0 0
      %544 = vmatprep.subr.bf16.mxu0 0
      %545 = vmatpush1.bf16.msra.mxu0 0
      %546 = vmatprep.subr.bf16.mxu0 0
      %547 = vmatpush1.bf16.msra.mxu0 0
      %548 = vmatprep.subr.bf16.mxu0 0
      %549 = vmatpush1.bf16.msra.mxu0 0
      %550 = vmatprep.subr.bf16.mxu0 0
      %551 = vmatpush1.bf16.msra.mxu0 0
      %552 = vmatprep.subr.bf16.mxu0 0
      %553 = vmatpush1.bf16.msra.mxu0 0
      %554 = vmatprep.subr.bf16.mxu0 0
      %555 = vmatpush1.bf16.msra.mxu0 0
      %556 = vmatprep.subr.bf16.mxu0 0
      %557 = vmatpush1.bf16.msra.mxu0 0
      %558 = vmatprep.subr.bf16.mxu0 0
      %559 = vmatpush1.bf16.msra.mxu0 0
      %560 = vmatprep.subr.bf16.mxu0 0
      %561 = vmatpush1.bf16.msra.mxu0 0
      %562 = vmatprep.subr.bf16.mxu0 0
      %563 = vmatpush1.bf16.msra.mxu0 0
      %564 = vmatprep.subr.bf16.mxu0 0
      %565 = vmatpush1.bf16.msra.mxu0 0
      %566 = vmatprep.subr.bf16.mxu0 0
      %567 = vmatpush1.bf16.msra.mxu0 0
      %568 = vmatprep.subr.bf16.mxu0 0
      %569 = vmatpush1.bf16.msra.mxu0 0
      %570 = vmatprep.subr.bf16.mxu0 0
      %571 = vmatpush1.bf16.msra.mxu0 0
      %572 = vmatprep.mubr.bf16.mxu0 0
      %573 = vmatmul.mubr.bf16.gmra.mrb[0].mxu0 %v538
      %v574 = vpop.f32.mrb[0].mxu0
      %v575 = vadd.f32 %v494, %v574
      %v576 = vpop.f32.mrb[0].mxu0
      %v577 = vpop.f32.mrb[0].mxu0
      %v578 = vadd.f32 %v497, %v577
      %v579 = vpop.f32.mrb[0].mxu0
      %580 = vdwg.mxu0
      %v581 = vld [vmem:[#allocation2 + $0x8] sm:$0xf]
      %v582 = vld [vmem:[#allocation2 + $0xc] sm:$0x1]
      %v583 = vld [vmem:[#allocation2 + $0x18] sm:$0xf]
      %v584 = vld [vmem:[#allocation2 + $0x1c] sm:$0x1]
      %s585 = scalar_lea.vmem %s3, 16
      %v586 = vld [vmem:[%s585] sm:$0xf]
      %v587 = vld [vmem:[%s585 + $0x4] sm:$0xf]
      %vm588 = vsmask.f32 3328
      %vm589 = vsmask.f32 7440
      %vm590 = vmor %vm588, %vm589
      %v592 = vshrl.u32 %v581, 16
      %v594 = vrot.slane %v592, 4
      %v595 = vshll.u32 %v581, 16
      %v597 = vrot.slane %v595, 5
      %v598 = vor.u32 %v594, %v597
      %v599 = vrot.slane %v598, 4
      %v601 = vshll.u32 %v582, 16
      %v603 = vrot.slane %v601, 5
      %v604 = vsel %vm590, %v599, %v603
      %v606 = vshrl.u32 %v583, 16
      %v608 = vrot.slane %v606, 4
      %v609 = vshll.u32 %v583, 16
      %v611 = vrot.slane %v609, 5
      %v612 = vor.u32 %v608, %v611
      %v613 = vrot.slane %v612, 4
      %v615 = vshll.u32 %v584, 16
      %v617 = vrot.slane %v615, 5
      %v618 = vsel %vm590, %v613, %v617
      %v619 = vunpack.c.l.b16 %v604
      %v620 = vunpack.c.l.b16 %v618
      %v621 = vpack.c.b16 %v620, %v619
      %v624 = vunpack.c.l.b16 %v586
      %v625 = vunpack.c.l.b16 %v587
      %v626 = vpack.c.b16 %v625, %v624
      %v629 = vsel %vm455, %v621, 0
      %631 = vmatprep.subr.bf16.mxu0 0
      %632 = vmatpush1.bf16.msra.mxu0 %v626
      %633 = vmatprep.subr.bf16.mxu0 0
      %634 = vmatpush1.bf16.msra.mxu0 0
      %635 = vmatprep.subr.bf16.mxu0 0
      %636 = vmatpush1.bf16.msra.mxu0 0
      %637 = vmatprep.subr.bf16.mxu0 0
      %638 = vmatpush1.bf16.msra.mxu0 0
      %639 = vmatprep.subr.bf16.mxu0 0
      %640 = vmatpush1.bf16.msra.mxu0 0
      %641 = vmatprep.subr.bf16.mxu0 0
      %642 = vmatpush1.bf16.msra.mxu0 0
      %643 = vmatprep.subr.bf16.mxu0 0
      %644 = vmatpush1.bf16.msra.mxu0 0
      %645 = vmatprep.subr.bf16.mxu0 0
      %646 = vmatpush1.bf16.msra.mxu0 0
      %647 = vmatprep.subr.bf16.mxu0 0
      %648 = vmatpush1.bf16.msra.mxu0 0
      %649 = vmatprep.subr.bf16.mxu0 0
      %650 = vmatpush1.bf16.msra.mxu0 0
      %651 = vmatprep.subr.bf16.mxu0 0
      %652 = vmatpush1.bf16.msra.mxu0 0
      %653 = vmatprep.subr.bf16.mxu0 0
      %654 = vmatpush1.bf16.msra.mxu0 0
      %655 = vmatprep.subr.bf16.mxu0 0
      %656 = vmatpush1.bf16.msra.mxu0 0
      %657 = vmatprep.subr.bf16.mxu0 0
      %658 = vmatpush1.bf16.msra.mxu0 0
      %659 = vmatprep.subr.bf16.mxu0 0
      %660 = vmatpush1.bf16.msra.mxu0 0
      %661 = vmatprep.subr.bf16.mxu0 0
      %662 = vmatpush1.bf16.msra.mxu0 0
      %663 = vmatprep.mubr.bf16.mxu0 0
      %664 = vmatmul.mubr.bf16.gmra.mrb[0].mxu0 %v629
      %v665 = vpop.f32.mrb[0].mxu0
      %v666 = vadd.f32 0.0, %v665
      %v667 = vpop.f32.mrb[0].mxu0
      %v668 = vpop.f32.mrb[0].mxu0
      %v669 = vadd.f32 0.0, %v668
      %v670 = vpop.f32.mrb[0].mxu0
      %671 = vdwg.mxu0
      %v672 = vadd.f32 %v575, %v666
      %v673 = vadd.f32 %v578, %v669
      %v674 = vld [vmem:[%s358 + $0x4] sm:$0x8]
      %v675 = vld [vmem:[%s358 + $0x8] sm:$0xf]
      %v676 = vld [vmem:[%s358 + $0x14] sm:$0x8]
      %v677 = vld [vmem:[%s358 + $0x18] sm:$0xf]
      %s678 = scalar_lea.vmem %s3, 24
      %v679 = vld [vmem:[%s678] sm:$0xf]
      %v680 = vld [vmem:[%s678 + $0x4] sm:$0xf]
      %v682 = vshrl.u32 %v674, 16
      %v684 = vrot.slane %v682, 7
      %v685 = vrot.slane %v684, 4
      %v687 = vshrl.u32 %v675, 16
      %v689 = vrot.slane %v687, 7
      %v690 = vshll.u32 %v675, 16
      %v692 = vor.u32 %v689, %v690
      %v693 = vsel %vm501, %v685, %v692
      %v695 = vshrl.u32 %v676, 16
      %v697 = vrot.slane %v695, 7
      %v698 = vrot.slane %v697, 4
      %v700 = vshrl.u32 %v677, 16
      %v702 = vrot.slane %v700, 7
      %v703 = vshll.u32 %v677, 16
      %v705 = vor.u32 %v702, %v703
      %v706 = vsel %vm501, %v698, %v705
      %v707 = vunpack.c.l.b16 %v693
      %v708 = vunpack.c.l.b16 %v706
      %v709 = vpack.c.b16 %v708, %v707
      %v712 = vunpack.c.l.b16 %v679
      %v713 = vunpack.c.l.b16 %v680
      %v714 = vpack.c.b16 %v713, %v712
      %v717 = vsel %vm455, %v709, 0
      %719 = vmatprep.subr.bf16.mxu0 0
      %720 = vmatpush1.bf16.msra.mxu0 %v714
      %721 = vmatprep.subr.bf16.mxu0 0
      %722 = vmatpush1.bf16.msra.mxu0 0
      %723 = vmatprep.subr.bf16.mxu0 0
      %724 = vmatpush1.bf16.msra.mxu0 0
      %725 = vmatprep.subr.bf16.mxu0 0
      %726 = vmatpush1.bf16.msra.mxu0 0
      %727 = vmatprep.subr.bf16.mxu0 0
      %728 = vmatpush1.bf16.msra.mxu0 0
      %729 = vmatprep.subr.bf16.mxu0 0
      %730 = vmatpush1.bf16.msra.mxu0 0
      %731 = vmatprep.subr.bf16.mxu0 0
      %732 = vmatpush1.bf16.msra.mxu0 0
      %733 = vmatprep.subr.bf16.mxu0 0
      %734 = vmatpush1.bf16.msra.mxu0 0
      %735 = vmatprep.subr.bf16.mxu0 0
      %736 = vmatpush1.bf16.msra.mxu0 0
      %737 = vmatprep.subr.bf16.mxu0 0
      %738 = vmatpush1.bf16.msra.mxu0 0
      %739 = vmatprep.subr.bf16.mxu0 0
      %740 = vmatpush1.bf16.msra.mxu0 0
      %741 = vmatprep.subr.bf16.mxu0 0
      %742 = vmatpush1.bf16.msra.mxu0 0
      %743 = vmatprep.subr.bf16.mxu0 0
      %744 = vmatpush1.bf16.msra.mxu0 0
      %745 = vmatprep.subr.bf16.mxu0 0
      %746 = vmatpush1.bf16.msra.mxu0 0
      %747 = vmatprep.subr.bf16.mxu0 0
      %748 = vmatpush1.bf16.msra.mxu0 0
      %749 = vmatprep.subr.bf16.mxu0 0
      %750 = vmatpush1.bf16.msra.mxu0 0
      %751 = vmatprep.mubr.bf16.mxu0 0
      %752 = vmatmul.mubr.bf16.gmra.mrb[0].mxu0 %v717
      %v753 = vpop.f32.mrb[0].mxu0
      %v754 = vadd.f32 0.0, %v753
      %v755 = vpop.f32.mrb[0].mxu0
      %v756 = vpop.f32.mrb[0].mxu0
      %v757 = vadd.f32 0.0, %v756
      %v758 = vpop.f32.mrb[0].mxu0
      %759 = vdwg.mxu0
      %v760 = vadd.f32 %v672, %v754
      %v761 = vadd.f32 %v673, %v757
      %s762 = scalar_lea.vmem %s3, 32
      %v763 = vld [vmem:[%s762] sm:$0xf]
      %v764 = vld [vmem:[%s762 + $0x4] sm:$0xf]
      %v767 = vunpack.c.l.b16 %v675
      %v768 = vunpack.c.l.b16 %v677
      %v769 = vpack.c.b16 %v768, %v767
      %v772 = vunpack.c.l.b16 %v763
      %v773 = vunpack.c.l.b16 %v764
      %v774 = vpack.c.b16 %v773, %v772
      %v777 = vsel %vm455, %v769, 0
      %779 = vmatprep.subr.bf16.mxu0 0
      %780 = vmatpush1.bf16.msra.mxu0 %v774
      %781 = vmatprep.subr.bf16.mxu0 0
      %782 = vmatpush1.bf16.msra.mxu0 0
      %783 = vmatprep.subr.bf16.mxu0 0
      %784 = vmatpush1.bf16.msra.mxu0 0
      %785 = vmatprep.subr.bf16.mxu0 0
      %786 = vmatpush1.bf16.msra.mxu0 0
      %787 = vmatprep.subr.bf16.mxu0 0
      %788 = vmatpush1.bf16.msra.mxu0 0
      %789 = vmatprep.subr.bf16.mxu0 0
      %790 = vmatpush1.bf16.msra.mxu0 0
      %791 = vmatprep.subr.bf16.mxu0 0
      %792 = vmatpush1.bf16.msra.mxu0 0
      %793 = vmatprep.subr.bf16.mxu0 0
      %794 = vmatpush1.bf16.msra.mxu0 0
      %795 = vmatprep.subr.bf16.mxu0 0
      %796 = vmatpush1.bf16.msra.mxu0 0
      %797 = vmatprep.subr.bf16.mxu0 0
      %798 = vmatpush1.bf16.msra.mxu0 0
      %799 = vmatprep.subr.bf16.mxu0 0
      %800 = vmatpush1.bf16.msra.mxu0 0
      %801 = vmatprep.subr.bf16.mxu0 0
      %802 = vmatpush1.bf16.msra.mxu0 0
      %803 = vmatprep.subr.bf16.mxu0 0
      %804 = vmatpush1.bf16.msra.mxu0 0
      %805 = vmatprep.subr.bf16.mxu0 0
      %806 = vmatpush1.bf16.msra.mxu0 0
      %807 = vmatprep.subr.bf16.mxu0 0
      %808 = vmatpush1.bf16.msra.mxu0 0
      %809 = vmatprep.subr.bf16.mxu0 0
      %810 = vmatpush1.bf16.msra.mxu0 0
      %811 = vmatprep.mubr.bf16.mxu0 0
      %812 = vmatmul.mubr.bf16.gmra.mrb[0].mxu0 %v777
      %v813 = vpop.f32.mrb[0].mxu0
      %v814 = vadd.f32 0.0, %v813
      %v815 = vpop.f32.mrb[0].mxu0
      %v816 = vpop.f32.mrb[0].mxu0
      %v817 = vadd.f32 0.0, %v816
      %v818 = vpop.f32.mrb[0].mxu0
      %819 = vdwg.mxu0
      %v820 = vadd.f32 %v760, %v814
      %v821 = vadd.f32 %v761, %v817
      %v822 = vld [vmem:[%s358 + $0x8] sm:$0xf]
      %v823 = vld [vmem:[%s358 + $0xc] sm:$0x1]
      %v824 = vld [vmem:[%s358 + $0x18] sm:$0xf]
      %v825 = vld [vmem:[%s358 + $0x1c] sm:$0x1]
      %s826 = scalar_lea.vmem %s3, 40
      %v827 = vld [vmem:[%s826] sm:$0xf]
      %v828 = vld [vmem:[%s826 + $0x4] sm:$0xf]
      %v830 = vshrl.u32 %v822, 16
      %v832 = vrot.slane %v830, 4
      %v833 = vshll.u32 %v822, 16
      %v835 = vrot.slane %v833, 5
      %v836 = vor.u32 %v832, %v835
      %v837 = vrot.slane %v836, 4
      %v839 = vshll.u32 %v823, 16
      %v841 = vrot.slane %v839, 5
      %v842 = vsel %vm590, %v837, %v841
      %v844 = vshrl.u32 %v824, 16
      %v846 = vrot.slane %v844, 4
      %v847 = vshll.u32 %v824, 16
      %v849 = vrot.slane %v847, 5
      %v850 = vor.u32 %v846, %v849
      %v851 = vrot.slane %v850, 4
      %v853 = vshll.u32 %v825, 16
      %v855 = vrot.slane %v853, 5
      %v856 = vsel %vm590, %v851, %v855
      %v857 = vunpack.c.l.b16 %v842
      %v858 = vunpack.c.l.b16 %v856
      %v859 = vpack.c.b16 %v858, %v857
      %v862 = vunpack.c.l.b16 %v827
      %v863 = vunpack.c.l.b16 %v828
      %v864 = vpack.c.b16 %v863, %v862
      %v867 = vsel %vm455, %v859, 0
      %869 = vmatprep.subr.bf16.mxu0 0
      %870 = vmatpush1.bf16.msra.mxu0 %v864
      %871 = vmatprep.subr.bf16.mxu0 0
      %872 = vmatpush1.bf16.msra.mxu0 0
      %873 = vmatprep.subr.bf16.mxu0 0
      %874 = vmatpush1.bf16.msra.mxu0 0
      %875 = vmatprep.subr.bf16.mxu0 0
      %876 = vmatpush1.bf16.msra.mxu0 0
      %877 = vmatprep.subr.bf16.mxu0 0
      %878 = vmatpush1.bf16.msra.mxu0 0
      %879 = vmatprep.subr.bf16.mxu0 0
      %880 = vmatpush1.bf16.msra.mxu0 0
      %881 = vmatprep.subr.bf16.mxu0 0
      %882 = vmatpush1.bf16.msra.mxu0 0
      %883 = vmatprep.subr.bf16.mxu0 0
      %884 = vmatpush1.bf16.msra.mxu0 0
      %885 = vmatprep.subr.bf16.mxu0 0
      %886 = vmatpush1.bf16.msra.mxu0 0
      %887 = vmatprep.subr.bf16.mxu0 0
      %888 = vmatpush1.bf16.msra.mxu0 0
      %889 = vmatprep.subr.bf16.mxu0 0
      %890 = vmatpush1.bf16.msra.mxu0 0
      %891 = vmatprep.subr.bf16.mxu0 0
      %892 = vmatpush1.bf16.msra.mxu0 0
      %893 = vmatprep.subr.bf16.mxu0 0
      %894 = vmatpush1.bf16.msra.mxu0 0
      %895 = vmatprep.subr.bf16.mxu0 0
      %896 = vmatpush1.bf16.msra.mxu0 0
      %897 = vmatprep.subr.bf16.mxu0 0
      %898 = vmatpush1.bf16.msra.mxu0 0
      %899 = vmatprep.subr.bf16.mxu0 0
      %900 = vmatpush1.bf16.msra.mxu0 0
      %901 = vmatprep.mubr.bf16.mxu0 0
      %902 = vmatmul.mubr.bf16.gmra.mrb[0].mxu0 %v867
      %v903 = vpop.f32.mrb[0].mxu0
      %v904 = vadd.f32 0.0, %v903
      %v905 = vpop.f32.mrb[0].mxu0
      %v906 = vpop.f32.mrb[0].mxu0
      %v907 = vadd.f32 0.0, %v906
      %v908 = vpop.f32.mrb[0].mxu0
      %909 = vdwg.mxu0
      %v910 = vadd.f32 %v820, %v904
      %v911 = vadd.f32 %v821, %v907
      %s912 = scalar_lea.vmem [#allocation2], 32
      %v913 = vld [vmem:[%s912 + $0x4] sm:$0x8]
      %v914 = vld [vmem:[%s912 + $0x8] sm:$0xf]
      %v915 = vld [vmem:[%s912 + $0x14] sm:$0x8]
      %v916 = vld [vmem:[%s912 + $0x18] sm:$0xf]
      %s917 = scalar_lea.vmem %s3, 48
      %v918 = vld [vmem:[%s917] sm:$0xf]
      %v919 = vld [vmem:[%s917 + $0x4] sm:$0xf]
      %v921 = vshrl.u32 %v913, 16
      %v923 = vrot.slane %v921, 7
      %v924 = vrot.slane %v923, 4
      %v926 = vshrl.u32 %v914, 16
      %v928 = vrot.slane %v926, 7
      %v929 = vshll.u32 %v914, 16
      %v931 = vor.u32 %v928, %v929
      %v932 = vsel %vm501, %v924, %v931
      %v934 = vshrl.u32 %v915, 16
      %v936 = vrot.slane %v934, 7
      %v937 = vrot.slane %v936, 4
      %v939 = vshrl.u32 %v916, 16
      %v941 = vrot.slane %v939, 7
      %v942 = vshll.u32 %v916, 16
      %v944 = vor.u32 %v941, %v942
      %v945 = vsel %vm501, %v937, %v944
      %v946 = vunpack.c.l.b16 %v932
      %v947 = vunpack.c.l.b16 %v945
      %v948 = vpack.c.b16 %v947, %v946
      %v951 = vunpack.c.l.b16 %v918
      %v952 = vunpack.c.l.b16 %v919
      %v953 = vpack.c.b16 %v952, %v951
      %v956 = vsel %vm455, %v948, 0
      %958 = vmatprep.subr.bf16.mxu0 0
      %959 = vmatpush1.bf16.msra.mxu0 %v953
      %960 = vmatprep.subr.bf16.mxu0 0
      %961 = vmatpush1.bf16.msra.mxu0 0
      %962 = vmatprep.subr.bf16.mxu0 0
      %963 = vmatpush1.bf16.msra.mxu0 0
      %964 = vmatprep.subr.bf16.mxu0 0
      %965 = vmatpush1.bf16.msra.mxu0 0
      %966 = vmatprep.subr.bf16.mxu0 0
      %967 = vmatpush1.bf16.msra.mxu0 0
      %968 = vmatprep.subr.bf16.mxu0 0
      %969 = vmatpush1.bf16.msra.mxu0 0
      %970 = vmatprep.subr.bf16.mxu0 0
      %971 = vmatpush1.bf16.msra.mxu0 0
      %972 = vmatprep.subr.bf16.mxu0 0
      %973 = vmatpush1.bf16.msra.mxu0 0
      %974 = vmatprep.subr.bf16.mxu0 0
      %975 = vmatpush1.bf16.msra.mxu0 0
      %976 = vmatprep.subr.bf16.mxu0 0
      %977 = vmatpush1.bf16.msra.mxu0 0
      %978 = vmatprep.subr.bf16.mxu0 0
      %979 = vmatpush1.bf16.msra.mxu0 0
      %980 = vmatprep.subr.bf16.mxu0 0
      %981 = vmatpush1.bf16.msra.mxu0 0
      %982 = vmatprep.subr.bf16.mxu0 0
      %983 = vmatpush1.bf16.msra.mxu0 0
      %984 = vmatprep.subr.bf16.mxu0 0
      %985 = vmatpush1.bf16.msra.mxu0 0
      %986 = vmatprep.subr.bf16.mxu0 0
      %987 = vmatpush1.bf16.msra.mxu0 0
      %988 = vmatprep.subr.bf16.mxu0 0
      %989 = vmatpush1.bf16.msra.mxu0 0
      %990 = vmatprep.mubr.bf16.mxu0 0
      %991 = vmatmul.mubr.bf16.gmra.mrb[0].mxu0 %v956
      %v992 = vpop.f32.mrb[0].mxu0
      %v993 = vadd.f32 0.0, %v992
      %v994 = vpop.f32.mrb[0].mxu0
      %v995 = vpop.f32.mrb[0].mxu0
      %v996 = vadd.f32 0.0, %v995
      %v997 = vpop.f32.mrb[0].mxu0
      %998 = vdwg.mxu0
      %v999 = vadd.f32 %v910, %v993
      %v1000 = vadd.f32 %v911, %v996
      %s1001 = scalar_lea.vmem %s3, 56
      %v1002 = vld [vmem:[%s1001] sm:$0xf]
      %v1003 = vld [vmem:[%s1001 + $0x4] sm:$0xf]
      %v1006 = vunpack.c.l.b16 %v914
      %v1007 = vunpack.c.l.b16 %v916
      %v1008 = vpack.c.b16 %v1007, %v1006
      %v1011 = vunpack.c.l.b16 %v1002
      %v1012 = vunpack.c.l.b16 %v1003
      %v1013 = vpack.c.b16 %v1012, %v1011
      %v1016 = vsel %vm455, %v1008, 0
      %1018 = vmatprep.subr.bf16.mxu0 0
      %1019 = vmatpush1.bf16.msra.mxu0 %v1013
      %1020 = vmatprep.subr.bf16.mxu0 0
      %1021 = vmatpush1.bf16.msra.mxu0 0
      %1022 = vmatprep.subr.bf16.mxu0 0
      %1023 = vmatpush1.bf16.msra.mxu0 0
      %1024 = vmatprep.subr.bf16.mxu0 0
      %1025 = vmatpush1.bf16.msra.mxu0 0
      %1026 = vmatprep.subr.bf16.mxu0 0
      %1027 = vmatpush1.bf16.msra.mxu0 0
      %1028 = vmatprep.subr.bf16.mxu0 0
      %1029 = vmatpush1.bf16.msra.mxu0 0
      %1030 = vmatprep.subr.bf16.mxu0 0
      %1031 = vmatpush1.bf16.msra.mxu0 0
      %1032 = vmatprep.subr.bf16.mxu0 0
      %1033 = vmatpush1.bf16.msra.mxu0 0
      %1034 = vmatprep.subr.bf16.mxu0 0
      %1035 = vmatpush1.bf16.msra.mxu0 0
      %1036 = vmatprep.subr.bf16.mxu0 0
      %1037 = vmatpush1.bf16.msra.mxu0 0
      %1038 = vmatprep.subr.bf16.mxu0 0
      %1039 = vmatpush1.bf16.msra.mxu0 0
      %1040 = vmatprep.subr.bf16.mxu0 0
      %1041 = vmatpush1.bf16.msra.mxu0 0
      %1042 = vmatprep.subr.bf16.mxu0 0
      %1043 = vmatpush1.bf16.msra.mxu0 0
      %1044 = vmatprep.subr.bf16.mxu0 0
      %1045 = vmatpush1.bf16.msra.mxu0 0
      %1046 = vmatprep.subr.bf16.mxu0 0
      %1047 = vmatpush1.bf16.msra.mxu0 0
      %1048 = vmatprep.subr.bf16.mxu0 0
      %1049 = vmatpush1.bf16.msra.mxu0 0
      %1050 = vmatprep.mubr.bf16.mxu0 0
      %1051 = vmatmul.mubr.bf16.gmra.mrb[0].mxu0 %v1016
      %v1052 = vpop.f32.mrb[0].mxu0
      %v1053 = vadd.f32 0.0, %v1052
      %v1054 = vpop.f32.mrb[0].mxu0
      %v1055 = vpop.f32.mrb[0].mxu0
      %v1056 = vadd.f32 0.0, %v1055
      %v1057 = vpop.f32.mrb[0].mxu0
      %1058 = vdwg.mxu0
      %v1059 = vadd.f32 %v999, %v1053
      %v1060 = vadd.f32 %v1000, %v1056
      %v1061 = vld [vmem:[%s912 + $0x8] sm:$0xf]
      %v1062 = vld [vmem:[%s912 + $0xc] sm:$0x1]
      %v1063 = vld [vmem:[%s912 + $0x18] sm:$0xf]
      %v1064 = vld [vmem:[%s912 + $0x1c] sm:$0x1]
      %s1065 = scalar_lea.vmem %s3, 64
      %v1066 = vld [vmem:[%s1065] sm:$0xf]
      %v1067 = vld [vmem:[%s1065 + $0x4] sm:$0xf]
      %v1069 = vshrl.u32 %v1061, 16
      %v1071 = vrot.slane %v1069, 4
      %v1072 = vshll.u32 %v1061, 16
      %v1074 = vrot.slane %v1072, 5
      %v1075 = vor.u32 %v1071, %v1074
      %v1076 = vrot.slane %v1075, 4
      %v1078 = vshll.u32 %v1062, 16
      %v1080 = vrot.slane %v1078, 5
      %v1081 = vsel %vm590, %v1076, %v1080
      %v1083 = vshrl.u32 %v1063, 16
      %v1085 = vrot.slane %v1083, 4
      %v1086 = vshll.u32 %v1063, 16
      %v1088 = vrot.slane %v1086, 5
      %v1089 = vor.u32 %v1085, %v1088
      %v1090 = vrot.slane %v1089, 4
      %v1092 = vshll.u32 %v1064, 16
      %v1094 = vrot.slane %v1092, 5
      %v1095 = vsel %vm590, %v1090, %v1094
      %v1096 = vunpack.c.l.b16 %v1081
      %v1097 = vunpack.c.l.b16 %v1095
      %v1098 = vpack.c.b16 %v1097, %v1096
      %v1101 = vunpack.c.l.b16 %v1066
      %v1102 = vunpack.c.l.b16 %v1067
      %v1103 = vpack.c.b16 %v1102, %v1101
      %v1106 = vsel %vm455, %v1098, 0
      %1108 = vmatprep.subr.bf16.mxu0 0
      %1109 = vmatpush1.bf16.msra.mxu0 %v1103
      %1110 = vmatprep.subr.bf16.mxu0 0
      %1111 = vmatpush1.bf16.msra.mxu0 0
      %1112 = vmatprep.subr.bf16.mxu0 0
      %1113 = vmatpush1.bf16.msra.mxu0 0
      %1114 = vmatprep.subr.bf16.mxu0 0
      %1115 = vmatpush1.bf16.msra.mxu0 0
      %1116 = vmatprep.subr.bf16.mxu0 0
      %1117 = vmatpush1.bf16.msra.mxu0 0
      %1118 = vmatprep.subr.bf16.mxu0 0
      %1119 = vmatpush1.bf16.msra.mxu0 0
      %1120 = vmatprep.subr.bf16.mxu0 0
      %1121 = vmatpush1.bf16.msra.mxu0 0
      %1122 = vmatprep.subr.bf16.mxu0 0
      %1123 = vmatpush1.bf16.msra.mxu0 0
      %1124 = vmatprep.subr.bf16.mxu0 0
      %1125 = vmatpush1.bf16.msra.mxu0 0
      %1126 = vmatprep.subr.bf16.mxu0 0
      %1127 = vmatpush1.bf16.msra.mxu0 0
      %1128 = vmatprep.subr.bf16.mxu0 0
      %1129 = vmatpush1.bf16.msra.mxu0 0
      %1130 = vmatprep.subr.bf16.mxu0 0
      %1131 = vmatpush1.bf16.msra.mxu0 0
      %1132 = vmatprep.subr.bf16.mxu0 0
      %1133 = vmatpush1.bf16.msra.mxu0 0
      %1134 = vmatprep.subr.bf16.mxu0 0
      %1135 = vmatpush1.bf16.msra.mxu0 0
      %1136 = vmatprep.subr.bf16.mxu0 0
      %1137 = vmatpush1.bf16.msra.mxu0 0
      %1138 = vmatprep.subr.bf16.mxu0 0
      %1139 = vmatpush1.bf16.msra.mxu0 0
      %1140 = vmatprep.mubr.bf16.mxu0 0
      %1141 = vmatmul.mubr.bf16.gmra.mrb[0].mxu0 %v1106
      %v1142 = vpop.f32.mrb[0].mxu0
      %v1143 = vadd.f32 0.0, %v1142
      %v1144 = vpop.f32.mrb[0].mxu0
      %v1145 = vpop.f32.mrb[0].mxu0
      %v1146 = vadd.f32 0.0, %v1145
      %v1147 = vpop.f32.mrb[0].mxu0
      %1148 = vdwg.mxu0
      %v1149 = vadd.f32 %v1059, %v1143
      %v1150 = vadd.f32 %v1060, %v1146
      %vm1151 = vcmask 64512
      %1152 = vst.msk [vmem:[%s353] sm:$0xff] %vm1151, %v1149
      %1153 = vst.msk [vmem:[%s353 + $0x8] sm:$0xff] %vm1151, %v1150
      %s1154 = smul.u32 2, %s20
      %p1155 = scmp.lt.s32.totalorder %s19, 1
      %s1156 = scalar_select %p1155, %s19, 1
      %p1157 = scmp.lt.s32.totalorder %s1154, 7
      %s1158 = scalar_select %p1157, %s1154, 7
      %s1159 = smul.addr %s1156, 8
      %s1160 = sadd.s32 %s1158, %s1159
      %s1161 = smul.addr %s1160, 8
      %s1162 = scalar_lea.vmem %s4, %s1161
      // Predicated region
      $region37: #{_lambda_.1} parent=35 // pred_check
        %p1163 = pneg %p168
      $region38: #{_lambda_.1} parent=35 // pred_check_branch
        %1165 = sbr.rel (%p1163) target = $region40
      $region39: #{_lambda_.1} parent=35 // pred_region
        %s1166 = smul.u32 2, %s20
      $region40: #{_lambda_.1} parent=35 // pred_fallthru
        _
    $region36: #{_lambda_.1} parent=5 // pred_fallthru
      _
    %p1167 = scmp.le.s32.totalorder 2, %s10
    // Predicated region
    $region41: #{_lambda_.1} parent=5 // pred_check
      %p1168 = pneg %p1167
    $region42: #{_lambda_.1} parent=5 // pred_check_branch
      %1170 = sbr.rel (%p1168) target = $region44
    $region43: #{_lambda_.1} parent=5 // pred_region
      %s1171 = ssub.s32 %s10, 2
      // Predicated region
      $region45: #{_lambda_.1} parent=43 // pred_check
        %p1172 = pneg %p174
      $region46: #{_lambda_.1} parent=43 // pred_check_branch
        %1174 = sbr.rel (%p1172) target = $region48
      $region47: #{_lambda_.1} parent=43 // pred_region
        %s1175 = smul.u32 2, %s22
        %p1176 = scmp.lt.s32.totalorder %s21, 1
        %s1177 = scalar_select %p1176, %s21, 1
        %p1178 = scmp.lt.s32.totalorder %s1175, 7
        %s1179 = scalar_select %p1178, %s1175, 7
        %s1180 = smul.addr %s1177, 8
        %s1181 = sadd.s32 %s1179, %s1180
        %s1182 = smul.addr %s1181, 8
        %s1183 = scalar_lea.vmem %s4, %s1182
      $region48: #{_lambda_.1} parent=43 // pred_fallthru
        _
    $region44: #{_lambda_.1} parent=5 // pred_fallthru
      _
  $region6: #{_lambda_.1} parent=0 // loop_footer
    %s14 = sadd.s32 1, %s10
  $region7: #{_lambda_.1} parent=0 // loop_footer_branch
    %9 = sbr.rel target = $region3
  $region8: #{_lambda_.1} parent=0 // loop_exit
    _

</llo_original>
